<compile_context>
chip_gen: v7x
topology: tpu7x:2x2x1
jax: 0.10.0
libtpu: 0.0.40
codegen_flags: <defaults>
</compile_context>

<pallas_src>
import jax
import jax.numpy as jnp
from jax.experimental import pallas as pl
from jax.experimental.pallas import tpu as pltpu


def _round_up(x, m):
    return ((x + m - 1) // m) * m


def cbow_kernel(counts_ref, emb_ref, w1_ref, b1_ref, w2_ref, b2_ref,
                out_ref, pooled_acc):
    # counts_ref: (tb, tv)   emb_ref: (tv, Ep)
    # w1_ref: (Ep, Hp)  b1_ref: (1, Hp)  w2_ref: (Hp, Lp)  b2_ref: (1, Lp)
    # out_ref: (tb, Lp)  pooled_acc: (tb, Ep) f32 scratch (resident across v)
    v = pl.program_id(1)

    @pl.when(v == 0)
    def _():
        pooled_acc[...] = jnp.zeros_like(pooled_acc)

    # Mean-pool as an MXU matmul: (counts / S) @ emb_table, 1/S pre-folded.
    pooled_acc[...] += jnp.dot(counts_ref[...], emb_ref[...],
                               preferred_element_type=jnp.float32)

    @pl.when(v == pl.num_programs(1) - 1)
    def _():
        # dropout == identity (eval mode)
        hidden = jnp.dot(pooled_acc[...], w1_ref[...],
                         preferred_element_type=jnp.float32) + b1_ref[...]
        hidden = jnp.maximum(hidden, 0.0)                      # relu
        preds = jnp.dot(hidden, w2_ref[...],
                        preferred_element_type=jnp.float32) + b2_ref[...]
        out_ref[...] = preds.astype(out_ref.dtype)


def cbow_forward(docs, emb_table, w1, b1, w2, b2):
    """docs: (S, B) int32, emb_table: (V, E), w1: (E, H), b1: (H,),
    w2: (H, L), b2: (L,).  Returns (B, L) float32 predictions.
    Linear weights are stored transposed w.r.t. nn.Linear (i.e. (in, out))."""
    S, B = docs.shape
    V, E = emb_table.shape
    H = w1.shape[1]
    L = w2.shape[1]

    # ---- pad to lane/sublane-friendly, MXU-dense shapes ---------------------
    if B <= 128:
        B_pad = _round_up(B, 8)
        tb = B_pad
    else:
        B_pad = _round_up(B, 128)
        tb = 128
    if V <= 512:
        V_pad = _round_up(V, 128)
        tv = V_pad
    else:
        # Tile the vocab reduction axis to cap VMEM (fits v7x's 64 MiB easily).
        V_pad = _round_up(V, 512)
        tv = 512
    E_pad = _round_up(E, 128)
    H_pad = _round_up(H, 128)
    L_pad = _round_up(L, 128)

    # ---- glue: scaled bag-of-words counts built directly at padded shape ----
    # (no (S, B, E) gather in HBM, no extra pad copy of counts)
    batch_idx = jnp.broadcast_to(jnp.arange(B, dtype=jnp.int32)[None, :], (S, B))
    counts_p = jnp.zeros((B_pad, V_pad), jnp.float32).at[batch_idx, docs].add(
        jnp.float32(1.0 / S))

    emb_p = jnp.pad(emb_table.astype(jnp.float32),
                    ((0, V_pad - V), (0, E_pad - E)))
    w1_p = jnp.pad(w1.astype(jnp.float32), ((0, E_pad - E), (0, H_pad - H)))
    b1_p = jnp.pad(b1.astype(jnp.float32), (0, H_pad - H)).reshape(1, H_pad)
    w2_p = jnp.pad(w2.astype(jnp.float32), ((0, H_pad - H), (0, L_pad - L)))
    b2_p = jnp.pad(b2.astype(jnp.float32), (0, L_pad - L)).reshape(1, L_pad)

    grid = (B_pad // tb, V_pad // tv)   # (1, 1) at the toy shapes below

    out = pl.pallas_call(
        cbow_kernel,
        out_shape=jax.ShapeDtypeStruct((B_pad, L_pad), jnp.float32),
        grid_spec=pltpu.PrefetchScalarGridSpec(
            num_scalar_prefetch=0,
            grid=grid,
            in_specs=[
                pl.BlockSpec((tb, tv), lambda b, v: (b, v)),       # counts
                pl.BlockSpec((tv, E_pad), lambda b, v: (v, 0)),    # emb_table
                pl.BlockSpec((E_pad, H_pad), lambda b, v: (0, 0)), # w1 (resident)
                pl.BlockSpec((1, H_pad), lambda b, v: (0, 0)),     # b1 (resident)
                pl.BlockSpec((H_pad, L_pad), lambda b, v: (0, 0)), # w2 (resident)
                pl.BlockSpec((1, L_pad), lambda b, v: (0, 0)),     # b2 (resident)
            ],
            out_specs=pl.BlockSpec((tb, L_pad), lambda b, v: (b, 0)),
            scratch_shapes=[pltpu.VMEM((tb, E_pad), jnp.float32)],
        ),
        compiler_params=pltpu.CompilerParams(
            dimension_semantics=("parallel", "arbitrary")),
    )(counts_p, emb_p, w1_p, b1_p, w2_p, b2_p)

    return out[:B, :L]


def reference_forward(docs, emb_table, w1, b1, w2, b2):
    embedded = jnp.take(emb_table, docs, axis=0)
    pooled = jnp.mean(embedded, axis=0)
    hidden = jnp.maximum(pooled @ w1 + b1, 0.0)
    return hidden @ w2 + b2


if __name__ == "__main__":
    # Small shapes consistent with the module's forward:
    vocab_size = 50
    num_label = 4
    emb_dim = 32
    hidden_size = 20
    seq_len = 8
    batch = 2

    key = jax.random.PRNGKey(0)
    k_docs, k_emb, k_w1, k_b1, k_w2, k_b2 = jax.random.split(key, 6)

    docs = jax.random.randint(k_docs, (seq_len, batch), 0, vocab_size,
                              dtype=jnp.int32)
    emb_table = jax.random.normal(k_emb, (vocab_size, emb_dim),
                                  dtype=jnp.float32) * 0.1
    # nn.Linear(emb_dim, hidden_size): weight (H, E) -> stored transposed (E, H)
    w1 = jax.random.normal(k_w1, (emb_dim, hidden_size),
                           dtype=jnp.float32) * 0.1
    b1 = jax.random.normal(k_b1, (hidden_size,), dtype=jnp.float32) * 0.1
    # nn.Linear(hidden_size, num_label): weight (L, H) -> stored transposed (H, L)
    w2 = jax.random.normal(k_w2, (hidden_size, num_label),
                           dtype=jnp.float32) * 0.1
    b2 = jax.random.normal(k_b2, (num_label,), dtype=jnp.float32) * 0.1

    out = jax.jit(cbow_forward)(docs, emb_table, w1, b1, w2, b2)
    out = jax.block_until_ready(out)

    ref = reference_forward(docs, emb_table, w1, b1, w2, b2)
    assert out.shape == (batch, num_label)
    assert jnp.allclose(out, ref, atol=1e-5, rtol=1e-5), (out, ref)

    print("KERNEL_OK")
</pallas_src>

<mosaic_0001>
module attributes {stable_mosaic.version = 11 : i64} {
  func.func private @main(%arg0: i32) attributes {dimension_semantics = [#tpu.dimension_semantics<core_parallel>], iteration_bounds = array<i64: 2>, tpu.core_type = #tpu.core_type<sc_scalar_subcore>, window_params = []} {
    return
  }
}

module attributes {stable_mosaic.version = 11 : i64} {
  func.func private @main(%arg0: i32) attributes {dimension_semantics = [#tpu.dimension_semantics<core_parallel>], iteration_bounds = array<i64: 2>, tpu.core_type = #tpu.core_type<sc_scalar_subcore>, window_params = []} {
    return
  }
}

module attributes {stable_mosaic.version = 11 : i64} {
  func.func @cbow_kernel(%arg0: i32, %arg1: i32, %arg2: memref<8x128xf32, #tpu.memory_space<vmem>>, %arg3: memref<128x128xf32, #tpu.memory_space<vmem>>, %arg4: memref<128x128xf32, #tpu.memory_space<vmem>>, %arg5: memref<1x128xf32, #tpu.memory_space<vmem>>, %arg6: memref<128x128xf32, #tpu.memory_space<vmem>>, %arg7: memref<1x128xf32, #tpu.memory_space<vmem>>, %arg8: memref<8x128xf32, #tpu.memory_space<vmem>>, %arg9: memref<8x128xf32, #tpu.memory_space<vmem>>) attributes {dimension_semantics = [#tpu.dimension_semantics<parallel>, #tpu.dimension_semantics<arbitrary>], iteration_bounds = array<i64: 1, 1>, scalar_prefetch = 0 : i64, scratch_operands = 1 : i64, tpu.core_type = #tpu.core_type<tc>, window_params = [{transform_indices = @transform_0, window_bounds = array<i64: 8, 128>}, {transform_indices = @transform_1, window_bounds = array<i64: 128, 128>}, {pipeline_mode = #tpu.pipeline_mode<synchronous>, transform_indices = @transform_2, window_bounds = array<i64: 128, 128>}, {pipeline_mode = #tpu.pipeline_mode<synchronous>, transform_indices = @transform_3, window_bounds = array<i64: 1, 128>}, {pipeline_mode = #tpu.pipeline_mode<synchronous>, transform_indices = @transform_4, window_bounds = array<i64: 128, 128>}, {pipeline_mode = #tpu.pipeline_mode<synchronous>, transform_indices = @transform_5, window_bounds = array<i64: 1, 128>}, {transform_indices = @transform_6, window_bounds = array<i64: 8, 128>}]} {
    %c0_i32 = arith.constant 0 : i32
    %0 = arith.cmpi eq, %arg1, %c0_i32 : i32
    %1 = arith.extui %0 : i1 to i32
    %c0_i32_0 = arith.constant 0 : i32
    %2 = arith.cmpi ne, %1, %c0_i32_0 : i32
    scf.if %2 {
      %cst_10 = arith.constant 0.000000e+00 : f32
      %12 = vector.broadcast %cst_10 : f32 to vector<8x128xf32>
      %c0_11 = arith.constant 0 : index
      %c0_12 = arith.constant 0 : index
      %13 = vector.load %arg9[%c0_11, %c0_12] : memref<8x128xf32, #tpu.memory_space<vmem>>, vector<8x128xf32>
      tpu.vector_store %arg9[%c0_11, %c0_12], %12 {strides = array<i32>} : memref<8x128xf32, #tpu.memory_space<vmem>>, vector<8x128xf32>,
    } else {
    }
    %c0 = arith.constant 0 : index
    %c0_1 = arith.constant 0 : index
    %3 = vector.load %arg9[%c0, %c0_1] : memref<8x128xf32, #tpu.memory_space<vmem>>, vector<8x128xf32>
    %c0_2 = arith.constant 0 : index
    %c0_3 = arith.constant 0 : index
    %4 = vector.load %arg2[%c0_2, %c0_3] : memref<8x128xf32, #tpu.memory_space<vmem>>, vector<8x128xf32>
    %c0_4 = arith.constant 0 : index
    %c0_5 = arith.constant 0 : index
    %5 = vector.load %arg3[%c0_4, %c0_5] : memref<128x128xf32, #tpu.memory_space<vmem>>, vector<128x128xf32>
    %cst = arith.constant dense<0.000000e+00> : vector<8x128xf32>
    %6 = tpu.matmul %4, %5, %cst {dimension_numbers = #tpu.dot_dimension_numbers<[1], [0], [0], [1], [0, 0, 1, 1], [], []>} : vector<8x128xf32>, vector<128x128xf32>, vector<8x128xf32> -> vector<8x128xf32>
    %7 = arith.addf %3, %6 : vector<8x128xf32>
    %c0_6 = arith.constant 0 : index
    %c0_7 = arith.constant 0 : index
    %8 = vector.load %arg9[%c0_6, %c0_7] : memref<8x128xf32, #tpu.memory_space<vmem>>, vector<8x128xf32>
    tpu.vector_store %arg9[%c0_6, %c0_7], %7 {strides = array<i32>} : memref<8x128xf32, #tpu.memory_space<vmem>>, vector<8x128xf32>,
    %c0_i32_8 = arith.constant 0 : i32
    %9 = arith.cmpi eq, %arg1, %c0_i32_8 : i32
    %10 = arith.extui %9 : i1 to i32
    %c0_i32_9 = arith.constant 0 : i32
    %11 = arith.cmpi ne, %10, %c0_i32_9 : i32
    scf.if %11 {
      %c0_10 = arith.constant 0 : index
      %c0_11 = arith.constant 0 : index
      %12 = vector.load %arg9[%c0_10, %c0_11] : memref<8x128xf32, #tpu.memory_space<vmem>>, vector<8x128xf32>
      %c0_12 = arith.constant 0 : index
      %c0_13 = arith.constant 0 : index
      %13 = vector.load %arg4[%c0_12, %c0_13] : memref<128x128xf32, #tpu.memory_space<vmem>>, vector<128x128xf32>
      %cst_14 = arith.constant dense<0.000000e+00> : vector<8x128xf32>
      %14 = tpu.matmul %12, %13, %cst_14 {dimension_numbers = #tpu.dot_dimension_numbers<[1], [0], [0], [1], [0, 0, 1, 1], [], []>} : vector<8x128xf32>, vector<128x128xf32>, vector<8x128xf32> -> vector<8x128xf32>
      %c0_15 = arith.constant 0 : index
      %c0_16 = arith.constant 0 : index
      %15 = vector.load %arg5[%c0_15, %c0_16] : memref<1x128xf32, #tpu.memory_space<vmem>>, vector<1x128xf32>
      %16 = vector.broadcast %15 : vector<1x128xf32> to vector<8x128xf32>
      %17 = arith.addf %14, %16 : vector<8x128xf32>
      %cst_17 = arith.constant 0.000000e+00 : f32
      %18 = vector.broadcast %cst_17 : f32 to vector<8x128xf32>
      %19 = arith.maximumf %17, %18 : vector<8x128xf32>
      %c0_18 = arith.constant 0 : index
      %c0_19 = arith.constant 0 : index
      %20 = vector.load %arg6[%c0_18, %c0_19] : memref<128x128xf32, #tpu.memory_space<vmem>>, vector<128x128xf32>
      %cst_20 = arith.constant dense<0.000000e+00> : vector<8x128xf32>
      %21 = tpu.matmul %19, %20, %cst_20 {dimension_numbers = #tpu.dot_dimension_numbers<[1], [0], [0], [1], [0, 0, 1, 1], [], []>} : vector<8x128xf32>, vector<128x128xf32>, vector<8x128xf32> -> vector<8x128xf32>
      %c0_21 = arith.constant 0 : index
      %c0_22 = arith.constant 0 : index
      %22 = vector.load %arg7[%c0_21, %c0_22] : memref<1x128xf32, #tpu.memory_space<vmem>>, vector<1x128xf32>
      %23 = vector.broadcast %22 : vector<1x128xf32> to vector<8x128xf32>
      %24 = arith.addf %21, %23 : vector<8x128xf32>
      %c0_23 = arith.constant 0 : index
      %c0_24 = arith.constant 0 : index
      %25 = vector.load %arg8[%c0_23, %c0_24] : memref<8x128xf32, #tpu.memory_space<vmem>>, vector<8x128xf32>
      tpu.vector_store %arg8[%c0_23, %c0_24], %24 {strides = array<i32>} : memref<8x128xf32, #tpu.memory_space<vmem>>, vector<8x128xf32>,
    } else {
    }
    return
  }
  func.func @transform_0(%arg0: i32, %arg1: i32) -> (i32, i32) {
    %c0_i32 = arith.constant 0 : i32
    return %arg0, %arg1 : i32, i32
  }
  func.func @transform_1(%arg0: i32, %arg1: i32) -> (i32, i32) {
    %c0_i32 = arith.constant 0 : i32
    %c0_i32_0 = arith.constant 0 : i32
    return %arg1, %c0_i32 : i32, i32
  }
  func.func @transform_2(%arg0: i32, %arg1: i32) -> (i32, i32) {
    %c0_i32 = arith.constant 0 : i32
    %c0_i32_0 = arith.constant 0 : i32
    %c0_i32_1 = arith.constant 0 : i32
    return %c0_i32, %c0_i32_0 : i32, i32
  }
  func.func @transform_3(%arg0: i32, %arg1: i32) -> (i32, i32) {
    %c0_i32 = arith.constant 0 : i32
    %c0_i32_0 = arith.constant 0 : i32
    %c0_i32_1 = arith.constant 0 : i32
    return %c0_i32, %c0_i32_0 : i32, i32
  }
  func.func @transform_4(%arg0: i32, %arg1: i32) -> (i32, i32) {
    %c0_i32 = arith.constant 0 : i32
    %c0_i32_0 = arith.constant 0 : i32
    %c0_i32_1 = arith.constant 0 : i32
    return %c0_i32, %c0_i32_0 : i32, i32
  }
  func.func @transform_5(%arg0: i32, %arg1: i32) -> (i32, i32) {
    %c0_i32 = arith.constant 0 : i32
    %c0_i32_0 = arith.constant 0 : i32
    %c0_i32_1 = arith.constant 0 : i32
    return %c0_i32, %c0_i32_0 : i32, i32
  }
  func.func @transform_6(%arg0: i32, %arg1: i32) -> (i32, i32) {
    %c0_i32 = arith.constant 0 : i32
    %c0_i32_0 = arith.constant 0 : i32
    return %arg0, %c0_i32 : i32, i32
  }
}

</mosaic_0001>

<llo_original>
// kernel: cbow_forward.1
$region0: #{cbow_forward.1}
  #allocation0 [shape = 'u32[]', space=smem, size = 0x4, offset = 0x4, fixed_abs, tag = 'smem constant byte address 0x4 - core index']
  #allocation1 [shape = 'u32[144,128]{1,0:T(1,128)}', space=vmem, size = 0x12000, scoped, tag = 'internal scratch']
  #allocation2 [shape = 'f32[8,128]{1,0:T(8,128)}', space=vmem, size = 0x1000, scoped, tag = 'scratch operand']
  %s0 = inlined_call_operand.hbm [shape: f32[8,128], index: 0, kind: input, shape index: {}]
  %s1 = inlined_call_operand.vmem [shape: f32[128,128], index: 1, kind: input, shape index: {}]
  %s2 = inlined_call_operand.vmem [shape: f32[128,128], index: 2, kind: input, shape index: {}]
  %s3 = inlined_call_operand.vmem [shape: f32[1,128], index: 3, kind: input, shape index: {}]
  %s4 = inlined_call_operand.vmem [shape: f32[128,128], index: 4, kind: input, shape index: {}]
  %s5 = inlined_call_operand.vmem [shape: f32[1,128], index: 5, kind: input, shape index: {}]
  %s6 = inlined_call_operand.vmem [shape: f32[8,128], index: 6, kind: output, shape index: {}]
  %s7 = sld [smem:[#allocation0]]
  $region46: #{cbow_forward.1} parent=0
    _
  %s9 = ssub.s32 1, %s7
  %s10 = scalar_select 0, %s9, %s7
  $region1: #{cbow_forward.1} parent=0
    #allocation3 [shape = 'u8[4096]{0}', space=vmem, size = 0x1000, scoped, tag = 'input window, operand 0, single buffered']
    #allocation4 [shape = 's32[1]{0}', space=sflag, size = 0x4, scoped, tag = 'scoped memory for cbow_forward.1']
    %11 = vsyncpa [#allocation4], 0
    // Predicated region
    $region2: #{cbow_forward.1} parent=1 // pred_check
      _
    $region3: #{cbow_forward.1} parent=1 // pred_check_branch
      %13 = sbr.rel (0) target = $region5
    $region4: #{cbow_forward.1} parent=1 // pred_region
      %s15 = ssub.s32 128, 128
      %16 = vsyncadd [#allocation4], %s15
      %s18 = sshll.u32 [#allocation3], 4
      %s19 = int_to_ptr.vmem [resolvable:$true] %s18
      %21 = dma.hbm_to_vmem [thread:$0]  %s0, 128, %s19, [#allocation4]
    $region5: #{cbow_forward.1} parent=1 // pred_fallthru
      _
    // Predicated region
    $region6: #{cbow_forward.1} parent=1 // pred_check
      _
    $region7: #{cbow_forward.1} parent=1 // pred_check_branch
      %23 = sbr.rel (0) target = $region9
    $region8: #{cbow_forward.1} parent=1 // pred_region
      _
    $region9: #{cbow_forward.1} parent=1 // pred_fallthru
      _
    // Predicated region
    $region10: #{cbow_forward.1} parent=1 // pred_check
      _
    $region11: #{cbow_forward.1} parent=1 // pred_check_branch
      %25 = sbr.rel (0) target = $region13
    $region12: #{cbow_forward.1} parent=1 // pred_region
      _
    $region13: #{cbow_forward.1} parent=1 // pred_fallthru
      _
    // Predicated region
    $region14: #{cbow_forward.1} parent=1 // pred_check
      _
    $region15: #{cbow_forward.1} parent=1 // pred_check_branch
      %27 = sbr.rel (0) target = $region17
    $region16: #{cbow_forward.1} parent=1 // pred_region
      _
    $region17: #{cbow_forward.1} parent=1 // pred_fallthru
      _
    // Predicated region
    $region18: #{cbow_forward.1} parent=1 // pred_check
      _
    $region19: #{cbow_forward.1} parent=1 // pred_check_branch
      %29 = sbr.rel (0) target = $region21
    $region20: #{cbow_forward.1} parent=1 // pred_region
      _
    $region21: #{cbow_forward.1} parent=1 // pred_fallthru
      _
    // Predicated region
    $region22: #{cbow_forward.1} parent=1 // pred_check
      _
    $region23: #{cbow_forward.1} parent=1 // pred_check_branch
      %31 = sbr.rel (0) target = $region25
    $region24: #{cbow_forward.1} parent=1 // pred_region
      _
    $region25: #{cbow_forward.1} parent=1 // pred_fallthru
      _
    // Predicated region
    $region26: #{cbow_forward.1} parent=1 // pred_check
      _
    $region27: #{cbow_forward.1} parent=1 // pred_check_branch
      %33 = sbr.rel (0) target = $region29
    $region28: #{cbow_forward.1} parent=1 // pred_region
      %34 = dma.done [#allocation4], 128
    $region29: #{cbow_forward.1} parent=1 // pred_fallthru
      _
    %p35 = scmp.eq.s32.totalorder 0, 0
    // Predicated region
    $region30: #{cbow_forward.1} parent=1 // pred_check
      %p36 = pneg %p35
    $region31: #{cbow_forward.1} parent=1 // pred_check_branch
      %38 = sbr.rel (%p36) target = $region33
    $region32: #{cbow_forward.1} parent=1 // pred_region
      %39 = vst [vmem:[#allocation2] sm:$0xff] 0.0
    $region33: #{cbow_forward.1} parent=1 // pred_fallthru
      _
    %v40 = vld [vmem:[#allocation2] sm:$0xff]
    %v41 = vld [vmem:[#allocation3] sm:$0xff]
    %v42 = vld [vmem:[%s1] sm:$0xff]
    %v43 = vld [vmem:[%s1 + $0x8] sm:$0xff]
    %v44 = vld [vmem:[%s1 + $0x10] sm:$0xff]
    %v45 = vld [vmem:[%s1 + $0x18] sm:$0xff]
    %v46 = vld [vmem:[%s1 + $0x20] sm:$0xff]
    %v47 = vld [vmem:[%s1 + $0x28] sm:$0xff]
    %v48 = vld [vmem:[%s1 + $0x30] sm:$0xff]
    %v49 = vld [vmem:[%s1 + $0x38] sm:$0xff]
    %v50 = vld [vmem:[%s1 + $0x40] sm:$0xff]
    %v51 = vld [vmem:[%s1 + $0x48] sm:$0xff]
    %v52 = vld [vmem:[%s1 + $0x50] sm:$0xff]
    %v53 = vld [vmem:[%s1 + $0x58] sm:$0xff]
    %v54 = vld [vmem:[%s1 + $0x60] sm:$0xff]
    %v55 = vld [vmem:[%s1 + $0x68] sm:$0xff]
    %v56 = vld [vmem:[%s1 + $0x70] sm:$0xff]
    %v57 = vld [vmem:[%s1 + $0x78] sm:$0xff]
    %58 = vmatprep.subr.mxu0 0.0
    %59 = vmatpush1.msra.mxu0 %v42
    %60 = vmatprep.subr.mxu0 0.0
    %61 = vmatpush1.msra.mxu0 %v43
    %62 = vmatprep.subr.mxu0 0.0
    %63 = vmatpush1.msra.mxu0 %v44
    %64 = vmatprep.subr.mxu0 0.0
    %65 = vmatpush1.msra.mxu0 %v45
    %66 = vmatprep.subr.mxu0 0.0
    %67 = vmatpush1.msra.mxu0 %v46
    %68 = vmatprep.subr.mxu0 0.0
    %69 = vmatpush1.msra.mxu0 %v47
    %70 = vmatprep.subr.mxu0 0.0
    %71 = vmatpush1.msra.mxu0 %v48
    %72 = vmatprep.subr.mxu0 0.0
    %73 = vmatpush1.msra.mxu0 %v49
    %74 = vmatprep.subr.mxu0 0.0
    %75 = vmatpush1.msra.mxu0 %v50
    %76 = vmatprep.subr.mxu0 0.0
    %77 = vmatpush1.msra.mxu0 %v51
    %78 = vmatprep.subr.mxu0 0.0
    %79 = vmatpush1.msra.mxu0 %v52
    %80 = vmatprep.subr.mxu0 0.0
    %81 = vmatpush1.msra.mxu0 %v53
    %82 = vmatprep.subr.mxu0 0.0
    %83 = vmatpush1.msra.mxu0 %v54
    %84 = vmatprep.subr.mxu0 0.0
    %85 = vmatpush1.msra.mxu0 %v55
    %86 = vmatprep.subr.mxu0 0.0
    %87 = vmatpush1.msra.mxu0 %v56
    %88 = vmatprep.subr.mxu0 0.0
    %89 = vmatpush1.msra.mxu0 %v57
    %90 = vmatprep.subr.mxu0 0.0
    %91 = vmatpush1.msra.mxu0 0.0
    %92 = vmatprep.subr.mxu0 0.0
    %93 = vmatpush1.msra.mxu0 0.0
    %94 = vmatprep.subr.mxu0 0.0
    %95 = vmatpush1.msra.mxu0 0.0
    %96 = vmatprep.subr.mxu0 0.0
    %97 = vmatpush1.msra.mxu0 0.0
    %98 = vmatprep.subr.mxu0 0.0
    %99 = vmatpush1.msra.mxu0 0.0
    %100 = vmatprep.subr.mxu0 0.0
    %101 = vmatpush1.msra.mxu0 0.0
    %102 = vmatprep.subr.mxu0 0.0
    %103 = vmatpush1.msra.mxu0 0.0
    %104 = vmatprep.subr.mxu0 0.0
    %105 = vmatpush1.msra.mxu0 0.0
    %106 = vmatprep.subr.mxu0 0.0
    %107 = vmatpush1.msra.mxu0 0.0
    %108 = vmatprep.subr.mxu0 0.0
    %109 = vmatpush1.msra.mxu0 0.0
    %110 = vmatprep.subr.mxu0 0.0
    %111 = vmatpush1.msra.mxu0 0.0
    %112 = vmatprep.subr.mxu0 0.0
    %113 = vmatpush1.msra.mxu0 0.0
    %114 = vmatprep.subr.mxu0 0.0
    %115 = vmatpush1.msra.mxu0 0.0
    %116 = vmatprep.subr.mxu0 0.0
    %117 = vmatpush1.msra.mxu0 0.0
    %118 = vmatprep.subr.mxu0 0.0
    %119 = vmatpush1.msra.mxu0 0.0
    %120 = vmatprep.subr.mxu0 0.0
    %121 = vmatpush1.msra.mxu0 0.0
    %122 = vmatprep.mubr.f32.mxu0 0.0
    %123 = vmatmul.mubr.f32.gmra.mrb[0].mxu0 %v41
    %v124 = vpop.f32.mrb[0].mxu0
    %v125 = vadd.f32 0.0, %v124
    %v126 = vpop.f32.mrb[0].mxu0
    %127 = vdwg.mxu0
    %v128 = vadd.f32 %v40, %v125
    %129 = vst [vmem:[#allocation2] sm:$0xff] %v128
    // Predicated region
    $region34: #{cbow_forward.1} parent=1 // pred_check
      %p130 = pneg %p35
    $region35: #{cbow_forward.1} parent=1 // pred_check_branch
      %132 = sbr.rel (%p130) target = $region37
    $region36: #{cbow_forward.1} parent=1 // pred_region
      %v133 = vld [vmem:[#allocation2] sm:$0xff]
      %v134 = vld [vmem:[%s2] sm:$0xff]
      %v135 = vld [vmem:[%s2 + $0x8] sm:$0xff]
      %v136 = vld [vmem:[%s2 + $0x10] sm:$0xff]
      %v137 = vld [vmem:[%s2 + $0x18] sm:$0xff]
      %v138 = vld [vmem:[%s2 + $0x20] sm:$0xff]
      %v139 = vld [vmem:[%s2 + $0x28] sm:$0xff]
      %v140 = vld [vmem:[%s2 + $0x30] sm:$0xff]
      %v141 = vld [vmem:[%s2 + $0x38] sm:$0xff]
      %v142 = vld [vmem:[%s2 + $0x40] sm:$0xff]
      %v143 = vld [vmem:[%s2 + $0x48] sm:$0xff]
      %v144 = vld [vmem:[%s2 + $0x50] sm:$0xff]
      %v145 = vld [vmem:[%s2 + $0x58] sm:$0xff]
      %v146 = vld [vmem:[%s2 + $0x60] sm:$0xff]
      %v147 = vld [vmem:[%s2 + $0x68] sm:$0xff]
      %v148 = vld [vmem:[%s2 + $0x70] sm:$0xff]
      %v149 = vld [vmem:[%s2 + $0x78] sm:$0xff]
      %v150 = vld [vmem:[%s3] sm:$0x1]
      %v152 = vlaneseq
      %v153 = vshrl.u32 %v152, 7
      %v154 = vsub.s32 0, %v153
      %v155 = vrot.slane %v150, %v154
      %157 = vmatprep.subr.mxu0 0.0
      %158 = vmatpush1.msra.mxu0 %v134
      %159 = vmatprep.subr.mxu0 0.0
      %160 = vmatpush1.msra.mxu0 %v135
      %161 = vmatprep.subr.mxu0 0.0
      %162 = vmatpush1.msra.mxu0 %v136
      %163 = vmatprep.subr.mxu0 0.0
      %164 = vmatpush1.msra.mxu0 %v137
      %165 = vmatprep.subr.mxu0 0.0
      %166 = vmatpush1.msra.mxu0 %v138
      %167 = vmatprep.subr.mxu0 0.0
      %168 = vmatpush1.msra.mxu0 %v139
      %169 = vmatprep.subr.mxu0 0.0
      %170 = vmatpush1.msra.mxu0 %v140
      %171 = vmatprep.subr.mxu0 0.0
      %172 = vmatpush1.msra.mxu0 %v141
      %173 = vmatprep.subr.mxu0 0.0
      %174 = vmatpush1.msra.mxu0 %v142
      %175 = vmatprep.subr.mxu0 0.0
      %176 = vmatpush1.msra.mxu0 %v143
      %177 = vmatprep.subr.mxu0 0.0
      %178 = vmatpush1.msra.mxu0 %v144
      %179 = vmatprep.subr.mxu0 0.0
      %180 = vmatpush1.msra.mxu0 %v145
      %181 = vmatprep.subr.mxu0 0.0
      %182 = vmatpush1.msra.mxu0 %v146
      %183 = vmatprep.subr.mxu0 0.0
      %184 = vmatpush1.msra.mxu0 %v147
      %185 = vmatprep.subr.mxu0 0.0
      %186 = vmatpush1.msra.mxu0 %v148
      %187 = vmatprep.subr.mxu0 0.0
      %188 = vmatpush1.msra.mxu0 %v149
      %189 = vmatprep.subr.mxu0 0.0
      %190 = vmatpush1.msra.mxu0 0.0
      %191 = vmatprep.subr.mxu0 0.0
      %192 = vmatpush1.msra.mxu0 0.0
      %193 = vmatprep.subr.mxu0 0.0
      %194 = vmatpush1.msra.mxu0 0.0
      %195 = vmatprep.subr.mxu0 0.0
      %196 = vmatpush1.msra.mxu0 0.0
      %197 = vmatprep.subr.mxu0 0.0
      %198 = vmatpush1.msra.mxu0 0.0
      %199 = vmatprep.subr.mxu0 0.0
      %200 = vmatpush1.msra.mxu0 0.0
      %201 = vmatprep.subr.mxu0 0.0
      %202 = vmatpush1.msra.mxu0 0.0
      %203 = vmatprep.subr.mxu0 0.0
      %204 = vmatpush1.msra.mxu0 0.0
      %205 = vmatprep.subr.mxu0 0.0
      %206 = vmatpush1.msra.mxu0 0.0
      %207 = vmatprep.subr.mxu0 0.0
      %208 = vmatpush1.msra.mxu0 0.0
      %209 = vmatprep.subr.mxu0 0.0
      %210 = vmatpush1.msra.mxu0 0.0
      %211 = vmatprep.subr.mxu0 0.0
      %212 = vmatpush1.msra.mxu0 0.0
      %213 = vmatprep.subr.mxu0 0.0
      %214 = vmatpush1.msra.mxu0 0.0
      %215 = vmatprep.subr.mxu0 0.0
      %216 = vmatpush1.msra.mxu0 0.0
      %217 = vmatprep.subr.mxu0 0.0
      %218 = vmatpush1.msra.mxu0 0.0
      %219 = vmatprep.subr.mxu0 0.0
      %220 = vmatpush1.msra.mxu0 0.0
      %221 = vmatprep.mubr.f32.mxu0 0.0
      %222 = vmatmul.mubr.f32.gmra.mrb[0].mxu0 %v133
      %v223 = vpop.f32.mrb[0].mxu0
      %v224 = vadd.f32 %v155, %v223
      %v225 = vpop.f32.mrb[0].mxu0
      %226 = vdwg.mxu0
      %v227 = vmax.f32 %v224, 0.0
      %v228 = vld [vmem:[%s4] sm:$0xff]
      %v229 = vld [vmem:[%s4 + $0x8] sm:$0xff]
      %v230 = vld [vmem:[%s4 + $0x10] sm:$0xff]
      %v231 = vld [vmem:[%s4 + $0x18] sm:$0xff]
      %v232 = vld [vmem:[%s4 + $0x20] sm:$0xff]
      %v233 = vld [vmem:[%s4 + $0x28] sm:$0xff]
      %v234 = vld [vmem:[%s4 + $0x30] sm:$0xff]
      %v235 = vld [vmem:[%s4 + $0x38] sm:$0xff]
      %v236 = vld [vmem:[%s4 + $0x40] sm:$0xff]
      %v237 = vld [vmem:[%s4 + $0x48] sm:$0xff]
      %v238 = vld [vmem:[%s4 + $0x50] sm:$0xff]
      %v239 = vld [vmem:[%s4 + $0x58] sm:$0xff]
      %v240 = vld [vmem:[%s4 + $0x60] sm:$0xff]
      %v241 = vld [vmem:[%s4 + $0x68] sm:$0xff]
      %v242 = vld [vmem:[%s4 + $0x70] sm:$0xff]
      %v243 = vld [vmem:[%s4 + $0x78] sm:$0xff]
      %v244 = vld [vmem:[%s5] sm:$0x1]
      %v246 = vlaneseq
      %v247 = vshrl.u32 %v246, 7
      %v248 = vsub.s32 0, %v247
      %v249 = vrot.slane %v244, %v248
      %251 = vmatprep.subr.mxu0 0.0
      %252 = vmatpush1.msra.mxu0 %v228
      %253 = vmatprep.subr.mxu0 0.0
      %254 = vmatpush1.msra.mxu0 %v229
      %255 = vmatprep.subr.mxu0 0.0
      %256 = vmatpush1.msra.mxu0 %v230
      %257 = vmatprep.subr.mxu0 0.0
      %258 = vmatpush1.msra.mxu0 %v231
      %259 = vmatprep.subr.mxu0 0.0
      %260 = vmatpush1.msra.mxu0 %v232
      %261 = vmatprep.subr.mxu0 0.0
      %262 = vmatpush1.msra.mxu0 %v233
      %263 = vmatprep.subr.mxu0 0.0
      %264 = vmatpush1.msra.mxu0 %v234
      %265 = vmatprep.subr.mxu0 0.0
      %266 = vmatpush1.msra.mxu0 %v235
      %267 = vmatprep.subr.mxu0 0.0
      %268 = vmatpush1.msra.mxu0 %v236
      %269 = vmatprep.subr.mxu0 0.0
      %270 = vmatpush1.msra.mxu0 %v237
      %271 = vmatprep.subr.mxu0 0.0
      %272 = vmatpush1.msra.mxu0 %v238
      %273 = vmatprep.subr.mxu0 0.0
      %274 = vmatpush1.msra.mxu0 %v239
      %275 = vmatprep.subr.mxu0 0.0
      %276 = vmatpush1.msra.mxu0 %v240
      %277 = vmatprep.subr.mxu0 0.0
      %278 = vmatpush1.msra.mxu0 %v241
      %279 = vmatprep.subr.mxu0 0.0
      %280 = vmatpush1.msra.mxu0 %v242
      %281 = vmatprep.subr.mxu0 0.0
      %282 = vmatpush1.msra.mxu0 %v243
      %283 = vmatprep.subr.mxu0 0.0
      %284 = vmatpush1.msra.mxu0 0.0
      %285 = vmatprep.subr.mxu0 0.0
      %286 = vmatpush1.msra.mxu0 0.0
      %287 = vmatprep.subr.mxu0 0.0
      %288 = vmatpush1.msra.mxu0 0.0
      %289 = vmatprep.subr.mxu0 0.0
      %290 = vmatpush1.msra.mxu0 0.0
      %291 = vmatprep.subr.mxu0 0.0
      %292 = vmatpush1.msra.mxu0 0.0
      %293 = vmatprep.subr.mxu0 0.0
      %294 = vmatpush1.msra.mxu0 0.0
      %295 = vmatprep.subr.mxu0 0.0
      %296 = vmatpush1.msra.mxu0 0.0
      %297 = vmatprep.subr.mxu0 0.0
      %298 = vmatpush1.msra.mxu0 0.0
      %299 = vmatprep.subr.mxu0 0.0
      %300 = vmatpush1.msra.mxu0 0.0
      %301 = vmatprep.subr.mxu0 0.0
      %302 = vmatpush1.msra.mxu0 0.0
      %303 = vmatprep.subr.mxu0 0.0
      %304 = vmatpush1.msra.mxu0 0.0
      %305 = vmatprep.subr.mxu0 0.0
      %306 = vmatpush1.msra.mxu0 0.0
      %307 = vmatprep.subr.mxu0 0.0
      %308 = vmatpush1.msra.mxu0 0.0
      %309 = vmatprep.subr.mxu0 0.0
      %310 = vmatpush1.msra.mxu0 0.0
      %311 = vmatprep.subr.mxu0 0.0
      %312 = vmatpush1.msra.mxu0 0.0
      %313 = vmatprep.subr.mxu0 0.0
      %314 = vmatpush1.msra.mxu0 0.0
      %315 = vmatprep.mubr.f32.mxu0 0.0
      %316 = vmatmul.mubr.f32.gmra.mrb[0].mxu0 %v227
      %v317 = vpop.f32.mrb[0].mxu0
      %v318 = vadd.f32 %v249, %v317
      %v319 = vpop.f32.mrb[0].mxu0
      %320 = vdwg.mxu0
      %321 = vst [vmem:[%s6] sm:$0xff] %v318
    $region37: #{cbow_forward.1} parent=1 // pred_fallthru
      _
    // Predicated region
    $region38: #{cbow_forward.1} parent=1 // pred_check
      _
    $region39: #{cbow_forward.1} parent=1 // pred_check_branch
      %323 = sbr.rel (0) target = $region41
    $region40: #{cbow_forward.1} parent=1 // pred_region
      _
    $region41: #{cbow_forward.1} parent=1 // pred_fallthru
      _
    // Predicated region
    $region42: #{cbow_forward.1} parent=1 // pred_check
      _
    $region43: #{cbow_forward.1} parent=1 // pred_check_branch
      %325 = sbr.rel (0) target = $region45
    $region44: #{cbow_forward.1} parent=1 // pred_region
      _
    $region45: #{cbow_forward.1} parent=1 // pred_fallthru
      _
    %326 = vsyncpa [#allocation4], 1

</llo_original>
